<compile_context>
chip_gen: v6e
topology: v6e:2x2x1
jax: 0.10.0
libtpu: 0.0.40
codegen_flags: <defaults>
</compile_context>

<pallas_src>
import functools

import jax
import jax.numpy as jnp
import numpy as np
from jax import lax
from jax.experimental import pallas as pl
from jax.experimental.pallas import tpu as pltpu

EPS = 1e-5


# --------------------------------------------------------------------------
# In-kernel building blocks
# --------------------------------------------------------------------------
def _conv1d_k3(x_rows, w_ref, L):
    """Conv1d(kernel=3, padding=1), bias-free, on TN flattened length-L rows.

    x_rows: (R, C) fp32 with R = TN*L (TN independent length-L sequences).
    w_ref : (Cin, 3*Cout) tap-stacked weights in the MXU dtype
            (columns [0:C)=tap0, [C:2C)=tap1, [2C:3C)=tap2).
    Returns (R, Cout) fp32.

    Roll-after-matmul: one unshifted (R, C) @ (C, 3C) MXU matmul (bf16 operands,
    fp32 accumulation), then realign tap0/tap2 by one row with XLU rolls and
    zero the rows that crossed a sequence boundary (row % L masks).
    """
    R = x_rows.shape[0]
    C = w_ref.shape[1] // 3
    y = jnp.dot(x_rows.astype(w_ref.dtype), w_ref[...],
                preferred_element_type=jnp.float32)           # (R, 3C) single MXU pass
    y0, y1, y2 = y[:, :C], y[:, C:2 * C], y[:, 2 * C:]
    pos = lax.broadcasted_iota(jnp.int32, (R, C), 0) % L       # position within sequence
    prev = jnp.where(pos == 0, 0.0, pltpu.roll(y0, 1, 0))          # y0 from row r-1
    nxt = jnp.where(pos == L - 1, 0.0, pltpu.roll(y2, R - 1, 0))   # y2 from row r+1
    return prev + y1 + nxt


def _pass_a_kernel(L, x_ref, w1_ref, h1_ref, s1_ref, ss1_ref):
    """conv1 (pre-BN, bf16 store) + per-block per-channel sum / sum-of-squares."""
    h = _conv1d_k3(x_ref[...].astype(jnp.float32), w1_ref, L)   # (R, C) fp32
    h1_ref[...] = h.astype(h1_ref.dtype)                        # bf16 intermediate
    s1_ref[0] = jnp.sum(h, axis=0, keepdims=True)               # fp32 partial stats
    ss1_ref[0] = jnp.sum(h * h, axis=0, keepdims=True)


def _pass_b_kernel(L, h1_ref, sc1_ref, sh1_ref, w2_ref, h2_ref, s2_ref, ss2_ref):
    """BN1 (folded scale/shift) + ReLU + conv2 (pre-BN) + BN2 partial stats."""
    h = jnp.maximum(h1_ref[...].astype(jnp.float32) * sc1_ref[...] + sh1_ref[...], 0.0)
    h = _conv1d_k3(h, w2_ref, L)                                 # (R, C) fp32
    h2_ref[...] = h.astype(h2_ref.dtype)                         # bf16 intermediate
    s2_ref[0] = jnp.sum(h, axis=0, keepdims=True)
    ss2_ref[0] = jnp.sum(h * h, axis=0, keepdims=True)


def _pass_c_kernel(L, pooling, x_ref, h2_ref, sc2_ref, sh2_ref, o_ref):
    """BN2 (folded scale/shift) + residual add + ReLU + MaxPool1d(pooling)."""
    h = x_ref[...].astype(jnp.float32) + (
        h2_ref[...].astype(jnp.float32) * sc2_ref[...] + sh2_ref[...])
    h = jnp.maximum(h, 0.0)
    R, C = h.shape
    TN, Lp = R // L, L // pooling
    if L % pooling == 0:
        # Sequence boundaries align with pool windows: one flat reshape + max.
        out = jnp.max(h.reshape(TN * Lp, pooling, C), axis=1)
    else:
        # PyTorch drops the trailing remainder rows of each sequence.
        out = jnp.max(
            h.reshape(TN, L, C)[:, :Lp * pooling].reshape(TN, Lp, pooling, C),
            axis=2).reshape(TN * Lp, C)
    # TODO(synk): replace the reshape+max with sublane-strided maxima to avoid a
    # possible relayout copy when `pooling` does not align with the 8-row tile.
    o_ref[...] = out.astype(o_ref.dtype)


# --------------------------------------------------------------------------
# Wrapper-side helpers
# --------------------------------------------------------------------------
def _bn_scale_shift(s, ss, gamma, beta, count):
    """Folded training-mode BN affine from global sum / sumsq (fp32, wrapper)."""
    mean = s / count
    var = jnp.maximum(ss / count - mean * mean, 0.0)      # biased, single-pass
    scale = gamma * lax.rsqrt(var + EPS)
    return scale, beta - mean * scale


def _vmem_limit_bytes():
    """Generation-aware scoped-VMEM limit (~48 MiB on v7x, ~100 MiB v5e/v6e)."""
    try:
        cap = pltpu.get_tpu_info().vmem_capacity_bytes
    except Exception:
        cap = 64 * 1024 * 1024                             # conservative fallback
    return int(min(100 * 1024 * 1024, cap - 16 * 1024 * 1024))


def _choose_block_batch(N, L, Lp, C, budget_bytes):
    """Largest divisor TN of N whose (TN*L, C) blocks fit the VMEM budget and
    keep sublane legality ((TN*L) % 8 == 0 and (TN*Lp) % 8 == 0, or TN == N)."""
    per_row = 2 * (4 + 2) * L * C + 2 * 4 * Lp * C          # double-buffered in/out
    legal = [tn for tn in range(1, N + 1)
             if N % tn == 0 and
             (tn == N or ((tn * L) % 8 == 0 and (tn * Lp) % 8 == 0))]
    fitting = [tn for tn in legal if tn * per_row <= budget_bytes]
    return max(fitting) if fitting else min(legal)


def conv3_1d_resmp(x_ncl, params, pooling=2, mxu_dtype=jnp.bfloat16,
                   act_dtype=jnp.bfloat16):
    """Forward of Conv3_1d_resmp (training-mode BN).  x_ncl: (N, C, L), Cin == Cout."""
    w1, b1, g1, bt1, w2, b2, g2, bt2 = params
    # Conv biases are cancelled exactly by training-mode BN mean subtraction.
    # TODO(synk): re-add b1/b2 if eval-mode (running-stats) BN is ever needed.
    del b1, b2

    N, C, L = x_ncl.shape
    Lp = L // pooling
    count = float(N * L)

    # NCL -> NLC -> flat (N*L, C): channels on lanes, batch*length on sublanes.
    # Kept in the caller's dtype; fp32/bf16 casts happen inside the kernels.
    # TODO(synk): for C far below 128 a lane-dense relayout (folding L onto
    # lanes) or channel padding would lift lane utilization.
    x_flat = jnp.transpose(x_ncl, (0, 2, 1)).reshape(N * L, C)

    # Tap-stacked weights: one (C, 3C) MXU matmul per conv instead of three.
    w1s = jnp.concatenate([w1[0], w1[1], w1[2]], axis=1).astype(mxu_dtype)
    w2s = jnp.concatenate([w2[0], w2[1], w2[2]], axis=1).astype(mxu_dtype)

    vmem_limit = _vmem_limit_bytes()
    TN = _choose_block_batch(N, L, Lp, C, int(0.6 * vmem_limit))
    nblk = N // TN

    cparams = pltpu.CompilerParams(dimension_semantics=("parallel",),
                                   vmem_limit_bytes=vmem_limit)

    row_spec = pl.BlockSpec((TN * L, C), lambda n: (n, 0))
    pool_spec = pl.BlockSpec((TN * Lp, C), lambda n: (n, 0))
    vec_spec = pl.BlockSpec((1, C), lambda n: (0, 0))
    stat_spec = pl.BlockSpec((1, 1, C), lambda n: (n, 0, 0))
    w_spec = pl.BlockSpec((C, 3 * C), lambda n: (0, 0))
    act_shape = jax.ShapeDtypeStruct((N * L, C), act_dtype)
    stat_shape = jax.ShapeDtypeStruct((nblk, 1, C), jnp.float32)

    # TODO(synk): for very long L / tiny N, additionally tile L with 1-row halos.

    # Pass A: conv1 -> h1 (pre-BN) + per-block BN1 partial statistics.
    h1, s1p, ss1p = pl.pallas_call(
        functools.partial(_pass_a_kernel, L),
        grid=(nblk,),
        in_specs=[row_spec, w_spec],
        out_specs=[row_spec, stat_spec, stat_spec],
        out_shape=[act_shape, stat_shape, stat_shape],
        compiler_params=cparams,
    )(x_flat, w1s)

    sc1, sh1 = _bn_scale_shift(s1p[:, 0].sum(0, keepdims=True),
                               ss1p[:, 0].sum(0, keepdims=True), g1, bt1, count)

    # Pass B: BN1 + ReLU + conv2 -> h2 (pre-BN) + per-block BN2 partial stats.
    h2, s2p, ss2p = pl.pallas_call(
        functools.partial(_pass_b_kernel, L),
        grid=(nblk,),
        in_specs=[row_spec, vec_spec, vec_spec, w_spec],
        out_specs=[row_spec, stat_spec, stat_spec],
        out_shape=[act_shape, stat_shape, stat_shape],
        compiler_params=cparams,
    )(h1, sc1, sh1, w2s)

    sc2, sh2 = _bn_scale_shift(s2p[:, 0].sum(0, keepdims=True),
                               ss2p[:, 0].sum(0, keepdims=True), g2, bt2, count)

    # Pass C: BN2 + residual + ReLU + MaxPool1d(pooling).
    out_flat = pl.pallas_call(
        functools.partial(_pass_c_kernel, L, pooling),
        grid=(nblk,),
        in_specs=[row_spec, row_spec, vec_spec, vec_spec],
        out_specs=pool_spec,
        out_shape=jax.ShapeDtypeStruct((N * Lp, C), x_ncl.dtype),
        compiler_params=cparams,
    )(x_flat, h2, sc2, sh2)

    # TODO(synk): fold this NLC->NCL transpose into pass C once C/Lp are
    # (8,128)-friendly; for small C a wrapper transpose is cheaper than an
    # in-kernel lane/sublane transpose.
    return jnp.transpose(out_flat.reshape(N, Lp, C), (0, 2, 1))


# --------------------------------------------------------------------------
# References (pure JAX) for correctness checking
# --------------------------------------------------------------------------
def _ref_mirror(x_ncl, params, pooling=2, mxu_dtype=jnp.bfloat16,
                act_dtype=jnp.bfloat16):
    """Mirrors the kernel's numerics (bias-free convs, single-pass stats,
    bf16 MXU operands, bf16 stored intermediates).  Tight structural check."""
    w1, b1, g1, bt1, w2, b2, g2, bt2 = params
    del b1, b2
    x = jnp.transpose(x_ncl, (0, 2, 1)).astype(jnp.float32)     # (N, L, C)
    N, L, C = x.shape
    count = float(N * L)

    def conv(h, w):
        hp = jnp.pad(h.astype(mxu_dtype), ((0, 0), (1, 1), (0, 0)))
        wc = w.astype(mxu_dtype)
        return (jnp.einsum('nlc,co->nlo', hp[:, :-2], wc[0],
                           preferred_element_type=jnp.float32) +
                jnp.einsum('nlc,co->nlo', hp[:, 1:-1], wc[1],
                           preferred_element_type=jnp.float32) +
                jnp.einsum('nlc,co->nlo', hp[:, 2:], wc[2],
                           preferred_element_type=jnp.float32))

    def bn(h_f32, g, bt):
        s = jnp.sum(h_f32, axis=(0, 1), keepdims=True)
        ss = jnp.sum(h_f32 * h_f32, axis=(0, 1), keepdims=True)
        mean = s / count
        var = jnp.maximum(ss / count - mean * mean, 0.0)
        scale = g * lax.rsqrt(var + EPS)
        shift = bt - mean * scale
        hq = h_f32.astype(act_dtype).astype(jnp.float32)   # stored-intermediate rounding
        return hq * scale + shift

    h = jnp.maximum(bn(conv(x, w1), g1, bt1), 0.0)
    h = bn(conv(h, w2), g2, bt2)
    out = jnp.maximum(x + h, 0.0)
    Lp = L // pooling
    out = out[:, :Lp * pooling].reshape(N, Lp, pooling, C).max(axis=2)
    return jnp.transpose(out, (0, 2, 1))


def _ref_pytorch(x_ncl, params, pooling=2):
    """Faithful fp32 reference (training-mode BN, conv biases included)."""
    w1, b1, g1, bt1, w2, b2, g2, bt2 = params
    x = jnp.transpose(x_ncl, (0, 2, 1)).astype(jnp.float32)
    N, L, C = x.shape

    def conv(h, w, b):
        hp = jnp.pad(h, ((0, 0), (1, 1), (0, 0)))
        return (jnp.einsum('nlc,co->nlo', hp[:, :-2], w[0]) +
                jnp.einsum('nlc,co->nlo', hp[:, 1:-1], w[1]) +
                jnp.einsum('nlc,co->nlo', hp[:, 2:], w[2]) + b)

    def bn(h, g, bt):
        mu = h.mean(axis=(0, 1), keepdims=True)
        var = ((h - mu) ** 2).mean(axis=(0, 1), keepdims=True)
        return (h - mu) / jnp.sqrt(var + EPS) * g + bt

    h = jnp.maximum(bn(conv(x, w1, b1), g1, bt1), 0.0)
    h = bn(conv(h, w2, b2), g2, bt2)
    out = jnp.maximum(x + h, 0.0)
    Lp = L // pooling
    out = out[:, :Lp * pooling].reshape(N, Lp, pooling, C).max(axis=2)
    return jnp.transpose(out, (0, 2, 1))


def init_params(key, channels):
    """Deterministic synthetic params. Conv weights stored as (3, Cin, Cout),
    i.e. torch_weight[o, c, k] -> w[k, c, o]; biases/BN params as (1, C)."""
    ks = jax.random.split(key, 8)
    C = channels
    w1 = 0.2 * jax.random.normal(ks[0], (3, C, C), jnp.float32)
    b1 = 0.1 * jax.random.normal(ks[1], (1, C), jnp.float32)
    g1 = 1.0 + 0.1 * jax.random.normal(ks[2], (1, C), jnp.float32)
    bt1 = 0.1 * jax.random.normal(ks[3], (1, C), jnp.float32)
    w2 = 0.2 * jax.random.normal(ks[4], (3, C, C), jnp.float32)
    b2 = 0.1 * jax.random.normal(ks[5], (1, C), jnp.float32)
    g2 = 1.0 + 0.1 * jax.random.normal(ks[6], (1, C), jnp.float32)
    bt2 = 0.1 * jax.random.normal(ks[7], (1, C), jnp.float32)
    return (w1, b1, g1, bt1, w2, b2, g2, bt2)


if __name__ == "__main__":
    key = jax.random.PRNGKey(0)
    k_x, k_p = jax.random.split(key)

    N, C, L, POOL = 2, 8, 16, 2          # residual add requires Cin == Cout
    x = jax.random.normal(k_x, (N, C, L), jnp.float32)   # PyTorch NCL layout
    params = init_params(k_p, C)

    out = jax.block_until_ready(conv3_1d_resmp(x, params, pooling=POOL))
    assert out.shape == (N, C, L // POOL), out.shape

    # Tight structural check vs. a reference mirroring the kernel's numerics
    # (bf16 MXU operands + bf16 stored intermediates): catches any shift/mask/
    # statistics/pooling bug.
    ref_m = jax.block_until_ready(_ref_mirror(x, params, pooling=POOL))
    np.testing.assert_allclose(np.asarray(out), np.asarray(ref_m),
                               rtol=5e-3, atol=5e-3)

    # Loose sanity check vs. the faithful fp32 (PyTorch-semantics) reference;
    # the remaining gap is only bf16 operand / stored-intermediate rounding.
    ref_f = jax.block_until_ready(_ref_pytorch(x, params, pooling=POOL))
    np.testing.assert_allclose(np.asarray(out), np.asarray(ref_f),
                               rtol=1e-1, atol=1e-1)

    print("KERNEL_OK")
</pallas_src>

<mosaic_0001>
module attributes {stable_mosaic.version = 11 : i64} {
  func.func @_pass_a_kernel(%arg0: i32, %arg1: memref<32x8xf32, #tpu.memory_space<vmem>>, %arg2: memref<8x24xbf16, #tpu.memory_space<vmem>>, %arg3: memref<32x8xbf16, #tpu.memory_space<vmem>>, %arg4: memref<1x1x8xf32, #tpu.memory_space<vmem>>, %arg5: memref<1x1x8xf32, #tpu.memory_space<vmem>>) attributes {dimension_semantics = [#tpu.dimension_semantics<parallel>], iteration_bounds = array<i64: 1>, scalar_prefetch = 0 : i64, scratch_operands = 0 : i64, tpu.core_type = #tpu.core_type<tc>, window_params = [{transform_indices = @transform_0, window_bounds = array<i64: 32, 8>}, {pipeline_mode = #tpu.pipeline_mode<synchronous>, transform_indices = @transform_1, window_bounds = array<i64: 8, 24>}, {transform_indices = @transform_2, window_bounds = array<i64: 32, 8>}, {transform_indices = @transform_3, window_bounds = array<i64: 1, 1, 8>}, {transform_indices = @transform_4, window_bounds = array<i64: 1, 1, 8>}]} {
    %c0 = arith.constant 0 : index
    %c0_0 = arith.constant 0 : index
    %0 = vector.load %arg1[%c0, %c0_0] : memref<32x8xf32, #tpu.memory_space<vmem>>, vector<32x8xf32>
    %1 = arith.truncf %0 : vector<32x8xf32> to vector<32x8xbf16>
    %c0_1 = arith.constant 0 : index
    %c0_2 = arith.constant 0 : index
    %2 = vector.load %arg2[%c0_1, %c0_2] : memref<8x24xbf16, #tpu.memory_space<vmem>>, vector<8x24xbf16>
    %cst = arith.constant dense<0.000000e+00> : vector<32x24xf32>
    %3 = tpu.matmul %1, %2, %cst {dimension_numbers = #tpu.dot_dimension_numbers<[1], [0], [0], [1], [0, 0, 1, 1], [], []>} : vector<32x8xbf16>, vector<8x24xbf16>, vector<32x24xf32> -> vector<32x24xf32>
    %4 = vector.extract_strided_slice %3 {offsets = [0, 0], sizes = [32, 8], strides = [1, 1]} : vector<32x24xf32> to vector<32x8xf32>
    %5 = vector.extract_strided_slice %3 {offsets = [0, 8], sizes = [32, 8], strides = [1, 1]} : vector<32x24xf32> to vector<32x8xf32>
    %6 = vector.extract_strided_slice %3 {offsets = [0, 16], sizes = [32, 8], strides = [1, 1]} : vector<32x24xf32> to vector<32x8xf32>
    %7 = tpu.iota {dimensions = array<i32: 0>} : vector<32x8xi32>
    %c16_i32 = arith.constant 16 : i32
    %c0_i32 = arith.constant 0 : i32
    %8 = arith.cmpi eq, %c16_i32, %c0_i32 : i32
    %c1_i32 = arith.constant 1 : i32
    %9 = arith.select %8, %c1_i32, %c16_i32 : i32
    %10 = vector.broadcast %9 : i32 to vector<32x8xi32>
    %11 = arith.remsi %7, %10 : vector<32x8xi32>
    %c0_i32_3 = arith.constant 0 : i32
    %12 = vector.broadcast %c0_i32_3 : i32 to vector<32x8xi32>
    %13 = arith.cmpi ne, %11, %12 : vector<32x8xi32>
    %c0_i32_4 = arith.constant 0 : i32
    %14 = vector.broadcast %c0_i32_4 : i32 to vector<32x8xi32>
    %15 = arith.cmpi slt, %11, %14 : vector<32x8xi32>
    %c0_i32_5 = arith.constant 0 : i32
    %16 = arith.cmpi slt, %9, %c0_i32_5 : i32
    %17 = vector.broadcast %16 : i1 to vector<32x8xi1>
    %18 = vector.broadcast %17 : vector<32x8xi1> to vector<32x8xi1>
    %19 = arith.xori %15, %18 : vector<32x8xi1>
    %20 = arith.andi %19, %13 : vector<32x8xi1>
    %21 = vector.broadcast %9 : i32 to vector<32x8xi32>
    %22 = arith.addi %11, %21 : vector<32x8xi32>
    %23 = arith.select %20, %22, %11 : vector<32x8xi1>, vector<32x8xi32>
    %c0_i32_6 = arith.constant 0 : i32
    %24 = vector.broadcast %c0_i32_6 : i32 to vector<32x8xi32>
    %25 = arith.cmpi eq, %23, %24 : vector<32x8xi32>
    %c1_i32_7 = arith.constant 1 : i32
    %26 = tpu.dynamic_rotate %4 by %c1_i32_7 dim 0 : vector<32x8xf32>, i32 -> vector<32x8xf32>
    %cst_8 = arith.constant 0.000000e+00 : f32
    %27 = vector.broadcast %cst_8 : f32 to vector<32x8xf32>
    %28 = arith.select %25, %27, %26 : vector<32x8xi1>, vector<32x8xf32>
    %c15_i32 = arith.constant 15 : i32
    %29 = vector.broadcast %c15_i32 : i32 to vector<32x8xi32>
    %30 = arith.cmpi eq, %23, %29 : vector<32x8xi32>
    %c31_i32 = arith.constant 31 : i32
    %31 = tpu.dynamic_rotate %6 by %c31_i32 dim 0 : vector<32x8xf32>, i32 -> vector<32x8xf32>
    %cst_9 = arith.constant 0.000000e+00 : f32
    %32 = vector.broadcast %cst_9 : f32 to vector<32x8xf32>
    %33 = arith.select %30, %32, %31 : vector<32x8xi1>, vector<32x8xf32>
    %34 = arith.addf %28, %5 : vector<32x8xf32>
    %35 = arith.addf %34, %33 : vector<32x8xf32>
    %36 = arith.truncf %35 : vector<32x8xf32> to vector<32x8xbf16>
    %c0_10 = arith.constant 0 : index
    %c0_11 = arith.constant 0 : index
    %37 = vector.load %arg3[%c0_10, %c0_11] : memref<32x8xbf16, #tpu.memory_space<vmem>>, vector<32x8xbf16>
    tpu.vector_store %arg3[%c0_10, %c0_11], %36 {strides = array<i32>} : memref<32x8xbf16, #tpu.memory_space<vmem>>, vector<32x8xbf16>,
    %cst_12 = arith.constant dense<0.000000e+00> : vector<8xf32>
    %38 = vector.multi_reduction <add>, %35, %cst_12 [0] : vector<32x8xf32> to vector<8xf32>
    %39 = vector.shape_cast %38 : vector<8xf32> to vector<1x8xf32>
    %c0_13 = arith.constant 0 : index
    %c0_14 = arith.constant 0 : index
    %c0_15 = arith.constant 0 : index
    %40 = vector.load %arg4[%c0_13, %c0_14, %c0_15] : memref<1x1x8xf32, #tpu.memory_space<vmem>>, vector<1x1x8xf32>
    %41 = vector.shape_cast %40 : vector<1x1x8xf32> to vector<1x8xf32>
    %42 = vector.shape_cast %39 : vector<1x8xf32> to vector<1x1x8xf32>
    tpu.vector_store %arg4[%c0_13, %c0_14, %c0_15], %42 {strides = array<i32>} : memref<1x1x8xf32, #tpu.memory_space<vmem>>, vector<1x1x8xf32>,
    %43 = arith.mulf %35, %35 : vector<32x8xf32>
    %cst_16 = arith.constant dense<0.000000e+00> : vector<8xf32>
    %44 = vector.multi_reduction <add>, %43, %cst_16 [0] : vector<32x8xf32> to vector<8xf32>
    %45 = vector.shape_cast %44 : vector<8xf32> to vector<1x8xf32>
    %c0_17 = arith.constant 0 : index
    %c0_18 = arith.constant 0 : index
    %c0_19 = arith.constant 0 : index
    %46 = vector.load %arg5[%c0_17, %c0_18, %c0_19] : memref<1x1x8xf32, #tpu.memory_space<vmem>>, vector<1x1x8xf32>
    %47 = vector.shape_cast %46 : vector<1x1x8xf32> to vector<1x8xf32>
    %48 = vector.shape_cast %45 : vector<1x8xf32> to vector<1x1x8xf32>
    tpu.vector_store %arg5[%c0_17, %c0_18, %c0_19], %48 {strides = array<i32>} : memref<1x1x8xf32, #tpu.memory_space<vmem>>, vector<1x1x8xf32>,
    return
  }
  func.func @transform_0(%arg0: i32) -> (i32, i32) {
    %c0_i32 = arith.constant 0 : i32
    %c0_i32_0 = arith.constant 0 : i32
    return %arg0, %c0_i32 : i32, i32
  }
  func.func @transform_1(%arg0: i32) -> (i32, i32) {
    %c0_i32 = arith.constant 0 : i32
    %c0_i32_0 = arith.constant 0 : i32
    %c0_i32_1 = arith.constant 0 : i32
    return %c0_i32, %c0_i32_0 : i32, i32
  }
  func.func @transform_2(%arg0: i32) -> (i32, i32) {
    %c0_i32 = arith.constant 0 : i32
    %c0_i32_0 = arith.constant 0 : i32
    return %arg0, %c0_i32 : i32, i32
  }
  func.func @transform_3(%arg0: i32) -> (i32, i32, i32) {
    %c0_i32 = arith.constant 0 : i32
    %c0_i32_0 = arith.constant 0 : i32
    %c0_i32_1 = arith.constant 0 : i32
    return %arg0, %c0_i32, %c0_i32_0 : i32, i32, i32
  }
  func.func @transform_4(%arg0: i32) -> (i32, i32, i32) {
    %c0_i32 = arith.constant 0 : i32
    %c0_i32_0 = arith.constant 0 : i32
    %c0_i32_1 = arith.constant 0 : i32
    return %arg0, %c0_i32, %c0_i32_0 : i32, i32, i32
  }
}

</mosaic_0001>

<llo_original>
// kernel: tpu_custom_call.1
$region0: #{tpu_custom_call.1}
  #allocation0 [shape = 'u32[]', space=smem, size = 0x4, offset = 0x4, fixed_abs, tag = 'smem constant byte address 0x4 - core index']
  #allocation1 [shape = 'u32[144,128]{1,0:T(1,128)}', space=vmem, size = 0x12000, scoped, tag = 'internal scratch']
  %s0 = inlined_call_operand.vmem [shape: f32[32,8], index: 0, kind: input, shape index: {}]
  %s1 = inlined_call_operand.vmem [shape: bf16[8,24], index: 1, kind: input, shape index: {}]
  %s2 = inlined_call_operand.vmem [shape: bf16[32,8], index: 2, kind: output, shape index: {0}]
  %s3 = inlined_call_operand.hbm [shape: f32[1,1,8], index: 3, kind: output, shape index: {1}]
  %s4 = inlined_call_operand.hbm [shape: f32[1,1,8], index: 4, kind: output, shape index: {2}]
  %5 = xla_tuple %s2, %s3, %s4
  %s6 = sld [smem:[#allocation0]]
  $region34: #{tpu_custom_call.1} parent=0
    _
  %s8 = ssub.s32 1, %s6
  %s9 = scalar_select 0, %s8, %s6
  $region1: #{tpu_custom_call.1} parent=0
    #allocation2 [shape = 'u8[512]{0}', space=vmem, size = 0x400, scoped, tag = 'output window, operand 1, single buffered']
    #allocation3 [shape = 's32[1]{0}', space=sflag, size = 0x4, scoped, tag = 'scoped memory for tpu_custom_call.1']
    #allocation4 [shape = 'u8[512]{0}', space=vmem, size = 0x400, scoped, tag = 'output window, operand 2, single buffered']
    #allocation5 [shape = 's32[1]{0}', space=sflag, size = 0x4, scoped, tag = 'scoped memory for tpu_custom_call.1']
    %10 = vsyncpa [#allocation3], 0
    %11 = vsyncpa [#allocation5], 0
    // Predicated region
    $region2: #{tpu_custom_call.1} parent=1 // pred_check
      _
    $region3: #{tpu_custom_call.1} parent=1 // pred_check_branch
      %13 = sbr.rel (0) target = $region5
    $region4: #{tpu_custom_call.1} parent=1 // pred_region
      _
    $region5: #{tpu_custom_call.1} parent=1 // pred_fallthru
      _
    // Predicated region
    $region6: #{tpu_custom_call.1} parent=1 // pred_check
      _
    $region7: #{tpu_custom_call.1} parent=1 // pred_check_branch
      %15 = sbr.rel (0) target = $region9
    $region8: #{tpu_custom_call.1} parent=1 // pred_region
      _
    $region9: #{tpu_custom_call.1} parent=1 // pred_fallthru
      _
    %v17 = vld [vmem:[%s0] sm:$0xff]
    %v18 = vld [vmem:[%s0 + $0x8] sm:$0xff]
    %v19 = vld [vmem:[%s0 + $0x10] sm:$0xff]
    %v20 = vld [vmem:[%s0 + $0x18] sm:$0xff]
    %v21 = vpack.c.bf16 %v18, %v17
    %v22 = vpack.c.bf16 %v20, %v19
    %v23 = vld [vmem:[%s1] sm:$0xf]
    %vm24 = vcmask 64512
    %v26 = vsel %vm24, %v21, 0
    %v29 = vsel %vm24, %v22, 0
    %vm31 = vcmask 1043456
    %v33 = vsel %vm31, %v23, 0
    %35 = vmatprep.subr.bf16.mxu0 0
    %36 = vmatpush1.bf16.msra.mxu0 0
    %37 = vmatprep.subr.bf16.mxu0 0
    %38 = vmatpush1.bf16.msra.mxu0 0
    %39 = vmatprep.subr.bf16.mxu0 0
    %40 = vmatpush1.bf16.msra.mxu0 0
    %41 = vmatprep.subr.bf16.mxu0 0
    %42 = vmatpush1.bf16.msra.mxu0 0
    %43 = vmatprep.subr.bf16.mxu0 0
    %44 = vmatpush1.bf16.msra.mxu0 0
    %45 = vmatprep.subr.bf16.mxu0 0
    %46 = vmatpush1.bf16.msra.mxu0 0
    %47 = vmatprep.subr.bf16.mxu0 0
    %48 = vmatpush1.bf16.msra.mxu0 0
    %49 = vmatprep.subr.bf16.mxu0 0
    %50 = vmatpush1.bf16.msra.mxu0 %v33
    %51 = vmatprep.subr.bf16.mxu0 0
    %52 = vmatpush2.bf16.msra.mxu0 0
    %53 = vmatprep.subr.bf16.mxu0 0
    %54 = vmatpush2.bf16.msra.mxu0 0
    %55 = vmatprep.subr.bf16.mxu0 0
    %56 = vmatpush2.bf16.msra.mxu0 0
    %57 = vmatprep.subr.bf16.mxu0 0
    %58 = vmatpush2.bf16.msra.mxu0 0
    %59 = vmatprep.subr.bf16.mxu0 0
    %60 = vmatpush2.bf16.msra.mxu0 0
    %61 = vmatprep.subr.bf16.mxu0 0
    %62 = vmatpush2.bf16.msra.mxu0 0
    %63 = vmatprep.subr.bf16.mxu0 0
    %64 = vmatpush2.bf16.msra.mxu0 0
    %65 = vmatprep.subr.bf16.mxu0 0
    %66 = vmatpush2.bf16.msra.mxu0 0
    %67 = vmatprep.mubr.bf16.mxu0 0
    %68 = vmatmul.mubr.bf16.gmra.mxu0 %v26
    %v69 = vpop.f32.mrf.mxu0
    %v70 = vadd.f32 0.0, %v69
    %v71 = vpop.f32.mrf.mxu0
    %v72 = vpop.f32.mrf.mxu0
    %v73 = vadd.f32 0.0, %v72
    %v74 = vpop.f32.mrf.mxu0
    %75 = vmatprep.mubr.bf16.mxu0 0
    %76 = vmatmul.mubr.bf16.gmra.mxu0 %v29
    %v77 = vpop.f32.mrf.mxu0
    %v78 = vadd.f32 0.0, %v77
    %v79 = vpop.f32.mrf.mxu0
    %v80 = vpop.f32.mrf.mxu0
    %v81 = vadd.f32 0.0, %v80
    %v82 = vpop.f32.mrf.mxu0
    %83 = vdwg.mxu0
    %v84 = vlaneseq
    %v85 = vshrl.u32 %v84, 7
    %v86 = vadd.s32 %v85, 8
    %v87 = vadd.s32 %v85, 16
    %v88 = vadd.s32 %v85, 24
    %vm89 = vcmp.lt.s32.totalorder %v85, 0
    %v90 = vsub.s32 0, %v85
    %v91 = vsel %vm89, %v90, %v85
    %v92 = vshrl.u32 %v91, 4
    %v93 = vand.u32 %v91, 15
    %v94 = vsub.s32 0, %v93
    %v95 = vsel %vm89, %v94, %v93
    %vm96 = vcmp.lt.s32.totalorder %v86, 0
    %v97 = vsub.s32 0, %v86
    %v98 = vsel %vm96, %v97, %v86
    %v99 = vshrl.u32 %v98, 4
    %v100 = vand.u32 %v98, 15
    %v101 = vsub.s32 0, %v100
    %v102 = vsel %vm96, %v101, %v100
    %vm103 = vcmp.lt.s32.totalorder %v87, 0
    %v104 = vsub.s32 0, %v87
    %v105 = vsel %vm103, %v104, %v87
    %v106 = vshrl.u32 %v105, 4
    %v107 = vand.u32 %v105, 15
    %v108 = vsub.s32 0, %v107
    %v109 = vsel %vm103, %v108, %v107
    %vm110 = vcmp.lt.s32.totalorder %v88, 0
    %v111 = vsub.s32 0, %v88
    %v112 = vsel %vm110, %v111, %v88
    %v113 = vshrl.u32 %v112, 4
    %v114 = vand.u32 %v112, 15
    %v115 = vsub.s32 0, %v114
    %v116 = vsel %vm110, %v115, %v114
    %vm117 = vcmp.ne.s32.totalorder %v95, 0
    %vm118 = vcmp.ne.s32.totalorder %v102, 0
    %vm119 = vcmp.ne.s32.totalorder %v109, 0
    %vm120 = vcmp.ne.s32.totalorder %v116, 0
    %vm121 = vcmp.lt.s32.totalorder %v95, 0
    %vm122 = vcmp.lt.s32.totalorder %v102, 0
    %vm123 = vcmp.lt.s32.totalorder %v109, 0
    %vm124 = vcmp.lt.s32.totalorder %v116, 0
    %vm125 = vmand %vm121, %vm117
    %vm126 = vmand %vm122, %vm118
    %vm127 = vmand %vm123, %vm119
    %vm128 = vmand %vm124, %vm120
    %v129 = vadd.s32 %v95, 16
    %v130 = vadd.s32 %v102, 16
    %v131 = vadd.s32 %v109, 16
    %v132 = vadd.s32 %v116, 16
    %v133 = vsel %vm125, %v129, %v95
    %v134 = vsel %vm126, %v130, %v102
    %v135 = vsel %vm127, %v131, %v109
    %v136 = vsel %vm128, %v132, %v116
    %vm137 = vcmp.eq.s32.totalorder %v133, 0
    %vm138 = vcmp.eq.s32.totalorder %v134, 0
    %vm139 = vcmp.eq.s32.totalorder %v135, 0
    %vm140 = vcmp.eq.s32.totalorder %v136, 0
    %v141 = vrot.slane %v70, 7
    %v142 = vrot.slane %v73, 7
    %v143 = vrot.slane %v78, 7
    %v144 = vrot.slane %v81, 7
    %vm145 = vcmp.lt.s32.totalorder %v85, 1
    %v146 = vsel %vm145, %v143, %v144
    %v147 = vsel %vm145, %v142, %v143
    %v148 = vsel %vm145, %v141, %v142
    %v149 = vsel %vm145, %v144, %v141
    %v150 = vsel %vm137, 0.0, %v149
    %v151 = vsel %vm138, 0.0, %v148
    %v152 = vsel %vm139, 0.0, %v147
    %v153 = vsel %vm140, 0.0, %v146
    %vm154 = vcmp.eq.s32.totalorder %v133, 15
    %vm155 = vcmp.eq.s32.totalorder %v134, 15
    %vm156 = vcmp.eq.s32.totalorder %v135, 15
    %vm157 = vcmp.eq.s32.totalorder %v136, 15
    %162 = vrot.lane.b32.xlu0 %v70, 112
    %v163 = vpop.permute.xlu0 %162
    %164 = vrot.lane.b32.xlu0 %v73, 112
    %v165 = vpop.permute.xlu0 %164
    %166 = vrot.lane.b32.xlu0 %v78, 112
    %v167 = vpop.permute.xlu0 %166
    %168 = vrot.lane.b32.xlu0 %v81, 112
    %v169 = vpop.permute.xlu0 %168
    %v174 = vrot.slane %v163, 1
    %v175 = vrot.slane %v165, 1
    %v176 = vrot.slane %v167, 1
    %v177 = vrot.slane %v169, 1
    %vm178 = vcmp.lt.s32.totalorder %v85, 7
    %v179 = vsel %vm178, %v176, %v177
    %v180 = vsel %vm178, %v175, %v176
    %v181 = vsel %vm178, %v174, %v175
    %v182 = vsel %vm178, %v177, %v174
    %v183 = vsel %vm154, 0.0, %v181
    %v184 = vsel %vm155, 0.0, %v180
    %v185 = vsel %vm156, 0.0, %v179
    %v186 = vsel %vm157, 0.0, %v182
    %187 = vrot.lane.b32.xlu0 %v70, 120
    %v188 = vpop.permute.xlu0 %187
    %189 = vrot.lane.b32.xlu0 %v73, 120
    %v190 = vpop.permute.xlu0 %189
    %191 = vrot.lane.b32.xlu0 %v78, 120
    %v192 = vpop.permute.xlu0 %191
    %193 = vrot.lane.b32.xlu0 %v81, 120
    %v194 = vpop.permute.xlu0 %193
    %v199 = vadd.f32 %v150, %v188
    %v200 = vadd.f32 %v151, %v190
    %v201 = vadd.f32 %v152, %v192
    %v202 = vadd.f32 %v153, %v194
    %v203 = vadd.f32 %v199, %v183
    %v204 = vadd.f32 %v200, %v184
    %v205 = vadd.f32 %v201, %v185
    %v206 = vadd.f32 %v202, %v186
    %v207 = vpack.c.bf16 %v204, %v203
    %v208 = vpack.c.bf16 %v206, %v205
    %v211 = vunpack.c.l.b16 %v207
    %v212 = vunpack.c.h.b16 %v207
    %v213 = vunpack.c.l.b16 %v208
    %v214 = vunpack.c.h.b16 %v208
    %v215 = vpack.c.b16 %v211, %v211
    %v216 = vpack.c.b16 %v212, %v212
    %v217 = vpack.c.b16 %v213, %v213
    %v218 = vpack.c.b16 %v214, %v214
    %vm223 = vcmask 60416
    %224 = vst.msk [vmem:[%s2] sm:$0xf] %vm223, %v215
    %225 = vst.msk [vmem:[%s2 + $0x4] sm:$0xf] %vm223, %v216
    %226 = vst.msk [vmem:[%s2 + $0x8] sm:$0xf] %vm223, %v217
    %227 = vst.msk [vmem:[%s2 + $0xc] sm:$0xf] %vm223, %v218
    %v228 = vsel %vm24, %v203, 0.0
    %v229 = vsel %vm24, %v204, 0.0
    %v230 = vadd.f32 %v228, %v229
    %v231 = vsel %vm24, %v205, 0.0
    %v232 = vadd.f32 %v230, %v231
    %v233 = vsel %vm24, %v206, 0.0
    %v234 = vadd.f32 %v232, %v233
    %v235 = vrot.slane %v234, 4
    %v236 = vadd.f32 %v234, %v235
    %v237 = vrot.slane %v236, 2
    %v238 = vadd.f32 %v236, %v237
    %v239 = vrot.slane %v238, 1
    %v240 = vadd.f32 %v238, %v239
    %vm241 = vcmask 57344
    %242 = vst.msk [vmem:[#allocation2] sm:$0x1] %vm241, %v240
    %v243 = vmul.f32 %v203, %v203
    %v244 = vmul.f32 %v204, %v204
    %v245 = vmul.f32 %v205, %v205
    %v246 = vmul.f32 %v206, %v206
    %v247 = vsel %vm24, %v243, 0.0
    %v248 = vsel %vm24, %v244, 0.0
    %v249 = vadd.f32 %v247, %v248
    %v250 = vsel %vm24, %v245, 0.0
    %v251 = vadd.f32 %v249, %v250
    %v252 = vsel %vm24, %v246, 0.0
    %v253 = vadd.f32 %v251, %v252
    %v254 = vrot.slane %v253, 4
    %v255 = vadd.f32 %v253, %v254
    %v256 = vrot.slane %v255, 2
    %v257 = vadd.f32 %v255, %v256
    %v258 = vrot.slane %v257, 1
    %v259 = vadd.f32 %v257, %v258
    %260 = vst.msk [vmem:[#allocation4] sm:$0x1] %vm241, %v259
    // Predicated region
    $region10: #{tpu_custom_call.1} parent=1 // pred_check
      _
    $region11: #{tpu_custom_call.1} parent=1 // pred_check_branch
      %262 = sbr.rel (0) target = $region13
    $region12: #{tpu_custom_call.1} parent=1 // pred_region
      _
    $region13: #{tpu_custom_call.1} parent=1 // pred_fallthru
      _
    // Predicated region
    $region14: #{tpu_custom_call.1} parent=1 // pred_check
      _
    $region15: #{tpu_custom_call.1} parent=1 // pred_check_branch
      %264 = sbr.rel (0) target = $region17
    $region16: #{tpu_custom_call.1} parent=1 // pred_region
      %s266 = ssub.s32 16, 16
      %267 = vsyncadd [#allocation3], %s266
      %s269 = sshll.u32 [#allocation2], 4
      %s270 = int_to_ptr.vmem [resolvable:$true] %s269
      %272 = dma.vmem_to_hbm [thread:$0]  %s270, 16, %s3, [#allocation3]
    $region17: #{tpu_custom_call.1} parent=1 // pred_fallthru
      _
    // Predicated region
    $region18: #{tpu_custom_call.1} parent=1 // pred_check
      _
    $region19: #{tpu_custom_call.1} parent=1 // pred_check_branch
      %274 = sbr.rel (0) target = $region21
    $region20: #{tpu_custom_call.1} parent=1 // pred_region
      %s276 = ssub.s32 16, 16
      %277 = vsyncadd [#allocation5], %s276
      %s279 = sshll.u32 [#allocation4], 4
      %s280 = int_to_ptr.vmem [resolvable:$true] %s279
      %282 = dma.vmem_to_hbm [thread:$0]  %s280, 16, %s4, [#allocation5]
    $region21: #{tpu_custom_call.1} parent=1 // pred_fallthru
      _
    // Predicated region
    $region22: #{tpu_custom_call.1} parent=1 // pred_check
      _
    $region23: #{tpu_custom_call.1} parent=1 // pred_check_branch
      %284 = sbr.rel (0) target = $region25
    $region24: #{tpu_custom_call.1} parent=1 // pred_region
      _
    $region25: #{tpu_custom_call.1} parent=1 // pred_fallthru
      _
    // Predicated region
    $region26: #{tpu_custom_call.1} parent=1 // pred_check
      _
    $region27: #{tpu_custom_call.1} parent=1 // pred_check_branch
      %286 = sbr.rel (0) target = $region29
    $region28: #{tpu_custom_call.1} parent=1 // pred_region
      %287 = dma.done [#allocation3], 16
    $region29: #{tpu_custom_call.1} parent=1 // pred_fallthru
      _
    // Predicated region
    $region30: #{tpu_custom_call.1} parent=1 // pred_check
      _
    $region31: #{tpu_custom_call.1} parent=1 // pred_check_branch
      %289 = sbr.rel (0) target = $region33
    $region32: #{tpu_custom_call.1} parent=1 // pred_region
      %290 = dma.done [#allocation5], 16
    $region33: #{tpu_custom_call.1} parent=1 // pred_fallthru
      _
    %291 = vsyncpa [#allocation3], 1
    %292 = vsyncpa [#allocation5], 1

</llo_original>
